<compile_context>
chip_gen: v7x
topology: tpu7x:2x2x1
jax: 0.10.0
libtpu: 0.0.40
codegen_flags: <defaults>
</compile_context>

<pallas_src>
import math

import jax
import jax.numpy as jnp
from jax.experimental import pallas as pl
from jax.experimental.pallas import tpu as pltpu


def _round_up(x, m):
    return ((x + m - 1) // m) * m


# ---------------------------------------------------------------------------
# Kernel: one fused matmul with f32 VMEM accumulator, bias folded into k==0 init.
# ---------------------------------------------------------------------------
def _fc_kernel(x_ref, w_ref, b_ref, o_ref, acc_ref):
    k = pl.program_id(2)

    @pl.when(k == 0)
    def _init():
        # Fold the bias add into the accumulator init (saves a full-tile VPU
        # pass in the epilogue; broadcast happens once, not per-k iteration).
        acc_ref[...] = jnp.broadcast_to(b_ref[...].astype(jnp.float32), acc_ref.shape)

    acc_ref[...] += jnp.dot(
        x_ref[...], w_ref[...], preferred_element_type=jnp.float32
    )

    @pl.when(k == pl.num_programs(2) - 1)
    def _store():
        o_ref[...] = acc_ref[...].astype(o_ref.dtype)


# ---------------------------------------------------------------------------
# Wrapper: K-concat fusion, bf16 cast, lane-dense padding, tiled grid.
# ---------------------------------------------------------------------------
def fc_layer(
    feat_c,
    feat_p,
    weight_c,
    weight_p,
    bias,
    feat_g=None,
    weight_g=None,
    *,
    compute_dtype=jnp.bfloat16,
    tm=256,
    tn=256,
    tk=512,
):
    n, _ = feat_c.shape
    out_feats = weight_c.shape[1]
    out_dtype = feat_c.dtype

    feats = [feat_c, feat_p]
    weights = [weight_c, weight_p]
    if feat_g is not None and weight_g is not None:
        feats.append(feat_g)
        weights.append(weight_g)

    # Fuse the 2-3 matmuls into a single one by concatenating along K.
    x = jnp.concatenate(feats, axis=1).astype(compute_dtype)
    w = jnp.concatenate(weights, axis=0).astype(compute_dtype)
    k_total = x.shape[1]

    # Clamp tile sizes for small problems while keeping (8, 128) legality.
    tm = min(tm, _round_up(n, 8))
    tn = min(tn, _round_up(out_feats, 128))
    tk = min(tk, _round_up(k_total, 128))

    n_p = _round_up(n, tm)
    k_p = _round_up(k_total, tk)
    o_p = _round_up(out_feats, tn)

    # Zero padding: extra K columns contribute 0 to the dot; extra N rows and
    # extra output columns are sliced away below.  Lane-dense (128-multiple)
    # output avoids masked partial stores.
    x = jnp.pad(x, ((0, n_p - n), (0, k_p - k_total)))
    w = jnp.pad(w, ((0, k_p - k_total), (0, o_p - out_feats)))
    b2 = jnp.pad(bias.astype(jnp.float32), (0, o_p - out_feats)).reshape(1, o_p)

    grid = (n_p // tm, o_p // tn, k_p // tk)

    cost = pl.CostEstimate(
        flops=2 * n * k_total * out_feats,
        transcendentals=0,
        bytes_accessed=(
            x.size * x.dtype.itemsize
            + w.size * w.dtype.itemsize
            + b2.size * 4
            + n_p * o_p * jnp.dtype(out_dtype).itemsize
        ),
    )

    out_padded = pl.pallas_call(
        _fc_kernel,
        out_shape=jax.ShapeDtypeStruct((n_p, o_p), out_dtype),
        grid_spec=pltpu.PrefetchScalarGridSpec(
            num_scalar_prefetch=0,
            grid=grid,
            in_specs=[
                pl.BlockSpec((tm, tk), lambda i, j, k: (i, k)),   # X tile
                pl.BlockSpec((tk, tn), lambda i, j, k: (k, j)),   # W tile
                pl.BlockSpec((1, tn), lambda i, j, k: (0, j)),    # bias tile
            ],
            out_specs=pl.BlockSpec((tm, tn), lambda i, j, k: (i, j)),
            scratch_shapes=[pltpu.VMEM((tm, tn), jnp.float32)],
        ),
        compiler_params=pltpu.CompilerParams(
            dimension_semantics=("parallel", "parallel", "arbitrary"),
        ),
        cost_estimate=cost,
    )(x, w, b2)

    return out_padded[:n, :out_feats]


# ---------------------------------------------------------------------------
# Deterministic parameter init (mirrors He-uniform bounds; bias = 0).
# ---------------------------------------------------------------------------
def init_params(key, in_feats, out_feats, third=False):
    bound = math.sqrt(6.0 / out_feats)
    kc, kp, kg = jax.random.split(key, 3)
    weight_c = jax.random.uniform(kc, (in_feats, out_feats), jnp.float32, -bound, bound)
    weight_p = jax.random.uniform(kp, (in_feats, out_feats), jnp.float32, -bound, bound)
    weight_g = (
        jax.random.uniform(kg, (in_feats, out_feats), jnp.float32, -bound, bound)
        if third
        else None
    )
    bias = jnp.zeros((out_feats,), jnp.float32)
    return weight_c, weight_p, weight_g, bias


def _reference(pairs, bias):
    """Reference with the same bf16 quantization of inputs, f32 math."""
    acc = bias.astype(jnp.float32)
    for f, w in pairs:
        f32 = f.astype(jnp.bfloat16).astype(jnp.float32)
        w32 = w.astype(jnp.bfloat16).astype(jnp.float32)
        acc = acc + f32 @ w32
    return acc


if __name__ == "__main__":
    key = jax.random.PRNGKey(0)
    k_params, kc, kp, kg = jax.random.split(key, 4)

    n_nodes = 8
    in_feats = 32
    out_feats = 8

    # ---- third=False path -------------------------------------------------
    weight_c, weight_p, _, bias = init_params(k_params, in_feats, out_feats, third=False)
    feat_c = jax.random.normal(kc, (n_nodes, in_feats), jnp.float32)
    feat_p = jax.random.normal(kp, (n_nodes, in_feats), jnp.float32)

    out2 = fc_layer(feat_c, feat_p, weight_c, weight_p, bias)
    out2 = jax.block_until_ready(out2)
    assert out2.shape == (n_nodes, out_feats)

    ref2_q = _reference([(feat_c, weight_c), (feat_p, weight_p)], bias)
    ref2_f32 = feat_c @ weight_c + feat_p @ weight_p + bias
    assert jnp.allclose(out2, ref2_q, atol=1e-3, rtol=1e-3)
    assert jnp.allclose(out2, ref2_f32, atol=1e-1, rtol=1e-1)  # bf16 input quantization

    # ---- third=True path --------------------------------------------------
    weight_c3, weight_p3, weight_g3, bias3 = init_params(
        k_params, in_feats, out_feats, third=True
    )
    feat_g = jax.random.normal(kg, (n_nodes, in_feats), jnp.float32)

    out3 = fc_layer(
        feat_c, feat_p, weight_c3, weight_p3, bias3, feat_g=feat_g, weight_g=weight_g3
    )
    out3 = jax.block_until_ready(out3)
    assert out3.shape == (n_nodes, out_feats)

    ref3_q = _reference(
        [(feat_c, weight_c3), (feat_p, weight_p3), (feat_g, weight_g3)], bias3
    )
    ref3_f32 = feat_c @ weight_c3 + feat_p @ weight_p3 + feat_g @ weight_g3 + bias3
    assert jnp.allclose(out3, ref3_q, atol=1e-3, rtol=1e-3)
    assert jnp.allclose(out3, ref3_f32, atol=1e-1, rtol=1e-1)  # bf16 input quantization

    print("KERNEL_OK")
</pallas_src>

<mosaic_0001>
module attributes {stable_mosaic.version = 11 : i64} {
  func.func @_fc_kernel(%arg0: i32, %arg1: i32, %arg2: i32, %arg3: memref<8x128xbf16, #tpu.memory_space<vmem>>, %arg4: memref<128x128xbf16, #tpu.memory_space<vmem>>, %arg5: memref<1x128xf32, #tpu.memory_space<vmem>>, %arg6: memref<8x128xf32, #tpu.memory_space<vmem>>, %arg7: memref<8x128xf32, #tpu.memory_space<vmem>>) attributes {dimension_semantics = [#tpu.dimension_semantics<parallel>, #tpu.dimension_semantics<parallel>, #tpu.dimension_semantics<arbitrary>], iteration_bounds = array<i64: 1, 1, 1>, scalar_prefetch = 0 : i64, scratch_operands = 1 : i64, tpu.core_type = #tpu.core_type<tc>, window_params = [{transform_indices = @transform_0, window_bounds = array<i64: 8, 128>}, {transform_indices = @transform_1, window_bounds = array<i64: 128, 128>}, {transform_indices = @transform_2, window_bounds = array<i64: 1, 128>}, {transform_indices = @transform_3, window_bounds = array<i64: 8, 128>}]} {
    %c0_i32 = arith.constant 0 : i32
    %0 = arith.cmpi eq, %arg2, %c0_i32 : i32
    %1 = arith.extui %0 : i1 to i32
    %c0_i32_0 = arith.constant 0 : i32
    %2 = arith.cmpi ne, %1, %c0_i32_0 : i32
    scf.if %2 {
      %c0_10 = arith.constant 0 : index
      %c0_11 = arith.constant 0 : index
      %12 = vector.load %arg5[%c0_10, %c0_11] : memref<1x128xf32, #tpu.memory_space<vmem>>, vector<1x128xf32>
      %13 = vector.shape_cast %12 : vector<1x128xf32> to vector<1x128xf32>
      %14 = vector.broadcast %13 : vector<1x128xf32> to vector<8x128xf32>
      %c0_12 = arith.constant 0 : index
      %c0_13 = arith.constant 0 : index
      %15 = vector.load %arg7[%c0_12, %c0_13] : memref<8x128xf32, #tpu.memory_space<vmem>>, vector<8x128xf32>
      tpu.vector_store %arg7[%c0_12, %c0_13], %14 {strides = array<i32>} : memref<8x128xf32, #tpu.memory_space<vmem>>, vector<8x128xf32>,
    } else {
    }
    %c0 = arith.constant 0 : index
    %c0_1 = arith.constant 0 : index
    %3 = vector.load %arg7[%c0, %c0_1] : memref<8x128xf32, #tpu.memory_space<vmem>>, vector<8x128xf32>
    %c0_2 = arith.constant 0 : index
    %c0_3 = arith.constant 0 : index
    %4 = vector.load %arg3[%c0_2, %c0_3] : memref<8x128xbf16, #tpu.memory_space<vmem>>, vector<8x128xbf16>
    %c0_4 = arith.constant 0 : index
    %c0_5 = arith.constant 0 : index
    %5 = vector.load %arg4[%c0_4, %c0_5] : memref<128x128xbf16, #tpu.memory_space<vmem>>, vector<128x128xbf16>
    %cst = arith.constant dense<0.000000e+00> : vector<8x128xf32>
    %6 = tpu.matmul %4, %5, %cst {dimension_numbers = #tpu.dot_dimension_numbers<[1], [0], [0], [1], [0, 0, 1, 1], [], []>} : vector<8x128xbf16>, vector<128x128xbf16>, vector<8x128xf32> -> vector<8x128xf32>
    %7 = arith.addf %3, %6 : vector<8x128xf32>
    %c0_6 = arith.constant 0 : index
    %c0_7 = arith.constant 0 : index
    %8 = vector.load %arg7[%c0_6, %c0_7] : memref<8x128xf32, #tpu.memory_space<vmem>>, vector<8x128xf32>
    tpu.vector_store %arg7[%c0_6, %c0_7], %7 {strides = array<i32>} : memref<8x128xf32, #tpu.memory_space<vmem>>, vector<8x128xf32>,
    %c0_i32_8 = arith.constant 0 : i32
    %9 = arith.cmpi eq, %arg2, %c0_i32_8 : i32
    %10 = arith.extui %9 : i1 to i32
    %c0_i32_9 = arith.constant 0 : i32
    %11 = arith.cmpi ne, %10, %c0_i32_9 : i32
    scf.if %11 {
      %c0_10 = arith.constant 0 : index
      %c0_11 = arith.constant 0 : index
      %12 = vector.load %arg7[%c0_10, %c0_11] : memref<8x128xf32, #tpu.memory_space<vmem>>, vector<8x128xf32>
      %c0_12 = arith.constant 0 : index
      %c0_13 = arith.constant 0 : index
      %13 = vector.load %arg6[%c0_12, %c0_13] : memref<8x128xf32, #tpu.memory_space<vmem>>, vector<8x128xf32>
      tpu.vector_store %arg6[%c0_12, %c0_13], %12 {strides = array<i32>} : memref<8x128xf32, #tpu.memory_space<vmem>>, vector<8x128xf32>,
    } else {
    }
    return
  }
  func.func @transform_0(%arg0: i32, %arg1: i32, %arg2: i32) -> (i32, i32) {
    %c0_i32 = arith.constant 0 : i32
    return %arg0, %arg2 : i32, i32
  }
  func.func @transform_1(%arg0: i32, %arg1: i32, %arg2: i32) -> (i32, i32) {
    %c0_i32 = arith.constant 0 : i32
    return %arg2, %arg1 : i32, i32
  }
  func.func @transform_2(%arg0: i32, %arg1: i32, %arg2: i32) -> (i32, i32) {
    %c0_i32 = arith.constant 0 : i32
    %c0_i32_0 = arith.constant 0 : i32
    return %c0_i32, %arg1 : i32, i32
  }
  func.func @transform_3(%arg0: i32, %arg1: i32, %arg2: i32) -> (i32, i32) {
    %c0_i32 = arith.constant 0 : i32
    return %arg0, %arg1 : i32, i32
  }
}

</mosaic_0001>

<llo_original>
// kernel: tpu_custom_call.1
$region0: #{tpu_custom_call.1}
  #allocation0 [shape = 'u32[]', space=smem, size = 0x4, offset = 0x4, fixed_abs, tag = 'smem constant byte address 0x4 - core index']
  #allocation1 [shape = 'u32[144,128]{1,0:T(1,128)}', space=vmem, size = 0x12000, scoped, tag = 'internal scratch']
  #allocation2 [shape = 'f32[8,128]{1,0:T(8,128)}', space=vmem, size = 0x1000, scoped, tag = 'scratch operand']
  %s0 = inlined_call_operand.hbm [shape: bf16[8,128], index: 0, kind: input, shape index: {}]
  %s1 = inlined_call_operand.hbm [shape: bf16[128,128], index: 1, kind: input, shape index: {}]
  %s2 = inlined_call_operand.vmem [shape: f32[1,128], index: 2, kind: input, shape index: {}]
  %s3 = inlined_call_operand.hbm [shape: f32[8,128], index: 3, kind: output, shape index: {}]
  %s4 = sld [smem:[#allocation0]]
  $region38: #{tpu_custom_call.1} parent=0
    _
  %s6 = ssub.s32 1, %s4
  %s7 = scalar_select 0, %s6, %s4
  $region1: #{tpu_custom_call.1} parent=0
    #allocation3 [shape = 'u8[2048]{0}', space=vmem, size = 0x800, scoped, tag = 'input window, operand 0, single buffered']
    #allocation4 [shape = 's32[1]{0}', space=sflag, size = 0x4, scoped, tag = 'scoped memory for tpu_custom_call.1']
    #allocation5 [shape = 's32[1]{0}', space=sflag, size = 0x4, scoped, tag = 'scoped memory for tpu_custom_call.1']
    #allocation6 [shape = 'u8[32768]{0}', space=vmem, size = 0x8000, scoped, tag = 'input window, operand 1, single buffered']
    #allocation7 [shape = 's32[1]{0}', space=sflag, size = 0x4, scoped, tag = 'scoped memory for tpu_custom_call.1']
    #allocation8 [shape = 'u8[4096]{0}', space=vmem, size = 0x1000, scoped, tag = 'output window, operand 0, single buffered']
    %8 = vsyncpa [#allocation4], 0
    %9 = vsyncpa [#allocation7], 0
    %10 = vsyncpa [#allocation5], 0
    // Predicated region
    $region2: #{tpu_custom_call.1} parent=1 // pred_check
      _
    $region3: #{tpu_custom_call.1} parent=1 // pred_check_branch
      %12 = sbr.rel (0) target = $region5
    $region4: #{tpu_custom_call.1} parent=1 // pred_region
      %s14 = ssub.s32 64, 64
      %15 = vsyncadd [#allocation4], %s14
      %s17 = sshll.u32 [#allocation3], 4
      %s18 = int_to_ptr.vmem [resolvable:$true] %s17
      %20 = dma.hbm_to_vmem [thread:$0]  %s0, 64, %s18, [#allocation4]
    $region5: #{tpu_custom_call.1} parent=1 // pred_fallthru
      _
    // Predicated region
    $region6: #{tpu_custom_call.1} parent=1 // pred_check
      _
    $region7: #{tpu_custom_call.1} parent=1 // pred_check_branch
      %22 = sbr.rel (0) target = $region9
    $region8: #{tpu_custom_call.1} parent=1 // pred_region
      %s24 = ssub.s32 1024, 1024
      %25 = vsyncadd [#allocation7], %s24
      %s26 = sshll.u32 [#allocation6], 4
      %s27 = int_to_ptr.vmem [resolvable:$true] %s26
      %32 = dma.hbm_to_vmem [thread:$0]  %s1, 1024, %s27, [#allocation7], 64, 64, 4
    $region9: #{tpu_custom_call.1} parent=1 // pred_fallthru
      _
    // Predicated region
    $region10: #{tpu_custom_call.1} parent=1 // pred_check
      _
    $region11: #{tpu_custom_call.1} parent=1 // pred_check_branch
      %34 = sbr.rel (0) target = $region13
    $region12: #{tpu_custom_call.1} parent=1 // pred_region
      _
    $region13: #{tpu_custom_call.1} parent=1 // pred_fallthru
      _
    // Predicated region
    $region14: #{tpu_custom_call.1} parent=1 // pred_check
      _
    $region15: #{tpu_custom_call.1} parent=1 // pred_check_branch
      %36 = sbr.rel (0) target = $region17
    $region16: #{tpu_custom_call.1} parent=1 // pred_region
      %37 = dma.done [#allocation4], 64
    $region17: #{tpu_custom_call.1} parent=1 // pred_fallthru
      _
    // Predicated region
    $region18: #{tpu_custom_call.1} parent=1 // pred_check
      _
    $region19: #{tpu_custom_call.1} parent=1 // pred_check_branch
      %39 = sbr.rel (0) target = $region21
    $region20: #{tpu_custom_call.1} parent=1 // pred_region
      %40 = dma.done [#allocation7], 1024
    $region21: #{tpu_custom_call.1} parent=1 // pred_fallthru
      _
    %p42 = scmp.eq.s32.totalorder 0, 0
    // Predicated region
    $region22: #{tpu_custom_call.1} parent=1 // pred_check
      %p43 = pneg %p42
    $region23: #{tpu_custom_call.1} parent=1 // pred_check_branch
      %45 = sbr.rel (%p43) target = $region25
    $region24: #{tpu_custom_call.1} parent=1 // pred_region
      %v46 = vld [vmem:[%s2] sm:$0x1]
      %v48 = vlaneseq
      %v49 = vshrl.u32 %v48, 7
      %v50 = vsub.s32 0, %v49
      %v51 = vrot.slane %v46, %v50
      %53 = vst [vmem:[#allocation2] sm:$0xff] %v51
    $region25: #{tpu_custom_call.1} parent=1 // pred_fallthru
      _
    %v54 = vld [vmem:[#allocation2] sm:$0xff]
    %v55 = vld [vmem:[#allocation3] sm:$0xf]
    %v56 = vld [vmem:[#allocation6] sm:$0xf]
    %v57 = vld [vmem:[#allocation6 + $0x4] sm:$0xf]
    %v58 = vld [vmem:[#allocation6 + $0x8] sm:$0xf]
    %v59 = vld [vmem:[#allocation6 + $0xc] sm:$0xf]
    %v60 = vld [vmem:[#allocation6 + $0x10] sm:$0xf]
    %v61 = vld [vmem:[#allocation6 + $0x14] sm:$0xf]
    %v62 = vld [vmem:[#allocation6 + $0x18] sm:$0xf]
    %v63 = vld [vmem:[#allocation6 + $0x1c] sm:$0xf]
    %v64 = vld [vmem:[#allocation6 + $0x20] sm:$0xf]
    %v65 = vld [vmem:[#allocation6 + $0x24] sm:$0xf]
    %v66 = vld [vmem:[#allocation6 + $0x28] sm:$0xf]
    %v67 = vld [vmem:[#allocation6 + $0x2c] sm:$0xf]
    %v68 = vld [vmem:[#allocation6 + $0x30] sm:$0xf]
    %v69 = vld [vmem:[#allocation6 + $0x34] sm:$0xf]
    %v70 = vld [vmem:[#allocation6 + $0x38] sm:$0xf]
    %v71 = vld [vmem:[#allocation6 + $0x3c] sm:$0xf]
    %v88 = vunpack.c.l.b16 %v56
    %v89 = vunpack.c.l.b16 %v57
    %v90 = vunpack.c.l.b16 %v58
    %v91 = vunpack.c.l.b16 %v59
    %v92 = vunpack.c.l.b16 %v60
    %v93 = vunpack.c.l.b16 %v61
    %v94 = vunpack.c.l.b16 %v62
    %v95 = vunpack.c.l.b16 %v63
    %v96 = vunpack.c.l.b16 %v64
    %v97 = vunpack.c.l.b16 %v65
    %v98 = vunpack.c.l.b16 %v66
    %v99 = vunpack.c.l.b16 %v67
    %v100 = vunpack.c.l.b16 %v68
    %v101 = vunpack.c.l.b16 %v69
    %v102 = vunpack.c.l.b16 %v70
    %v103 = vunpack.c.l.b16 %v71
    %v104 = vpack.c.b16 %v89, %v88
    %v105 = vpack.c.b16 %v91, %v90
    %v106 = vpack.c.b16 %v93, %v92
    %v107 = vpack.c.b16 %v95, %v94
    %v108 = vpack.c.b16 %v97, %v96
    %v109 = vpack.c.b16 %v99, %v98
    %v110 = vpack.c.b16 %v101, %v100
    %v111 = vpack.c.b16 %v103, %v102
    %120 = vmatprep.subr.bf16.mxu0 0
    %121 = vmatpush1.bf16.msra.mxu0 %v104
    %122 = vmatprep.subr.bf16.mxu0 0
    %123 = vmatpush1.bf16.msra.mxu0 %v105
    %124 = vmatprep.subr.bf16.mxu0 0
    %125 = vmatpush1.bf16.msra.mxu0 %v106
    %126 = vmatprep.subr.bf16.mxu0 0
    %127 = vmatpush1.bf16.msra.mxu0 %v107
    %128 = vmatprep.subr.bf16.mxu0 0
    %129 = vmatpush1.bf16.msra.mxu0 %v108
    %130 = vmatprep.subr.bf16.mxu0 0
    %131 = vmatpush1.bf16.msra.mxu0 %v109
    %132 = vmatprep.subr.bf16.mxu0 0
    %133 = vmatpush1.bf16.msra.mxu0 %v110
    %134 = vmatprep.subr.bf16.mxu0 0
    %135 = vmatpush1.bf16.msra.mxu0 %v111
    %136 = vmatprep.subr.bf16.mxu0 0
    %137 = vmatpush1.bf16.msra.mxu0 0
    %138 = vmatprep.subr.bf16.mxu0 0
    %139 = vmatpush1.bf16.msra.mxu0 0
    %140 = vmatprep.subr.bf16.mxu0 0
    %141 = vmatpush1.bf16.msra.mxu0 0
    %142 = vmatprep.subr.bf16.mxu0 0
    %143 = vmatpush1.bf16.msra.mxu0 0
    %144 = vmatprep.subr.bf16.mxu0 0
    %145 = vmatpush1.bf16.msra.mxu0 0
    %146 = vmatprep.subr.bf16.mxu0 0
    %147 = vmatpush1.bf16.msra.mxu0 0
    %148 = vmatprep.subr.bf16.mxu0 0
    %149 = vmatpush1.bf16.msra.mxu0 0
    %150 = vmatprep.subr.bf16.mxu0 0
    %151 = vmatpush1.bf16.msra.mxu0 0
    %152 = vmatprep.mubr.bf16.mxu0 0
    %153 = vmatmul.mubr.bf16.gmra.mrb[0].mxu0 %v55
    %v154 = vpop.f32.mrb[0].mxu0
    %v155 = vadd.f32 0.0, %v154
    %v156 = vpop.f32.mrb[0].mxu0
    %v157 = vpop.f32.mrb[0].mxu0
    %v158 = vpop.f32.mrb[0].mxu0
    %159 = vdwg.mxu0
    %v160 = vadd.f32 %v54, %v155
    %161 = vst [vmem:[#allocation2] sm:$0xff] %v160
    // Predicated region
    $region26: #{tpu_custom_call.1} parent=1 // pred_check
      %p162 = pneg %p42
    $region27: #{tpu_custom_call.1} parent=1 // pred_check_branch
      %164 = sbr.rel (%p162) target = $region29
    $region28: #{tpu_custom_call.1} parent=1 // pred_region
      %v165 = vld [vmem:[#allocation2] sm:$0xff]
      %166 = vst [vmem:[#allocation8] sm:$0xff] %v165
    $region29: #{tpu_custom_call.1} parent=1 // pred_fallthru
      _
    // Predicated region
    $region30: #{tpu_custom_call.1} parent=1 // pred_check
      _
    $region31: #{tpu_custom_call.1} parent=1 // pred_check_branch
      %168 = sbr.rel (0) target = $region33
    $region32: #{tpu_custom_call.1} parent=1 // pred_region
      %s170 = ssub.s32 128, 128
      %171 = vsyncadd [#allocation5], %s170
      %s173 = sshll.u32 [#allocation8], 4
      %s174 = int_to_ptr.vmem [resolvable:$true] %s173
      %176 = dma.vmem_to_hbm [thread:$0]  %s174, 128, %s3, [#allocation5]
    $region33: #{tpu_custom_call.1} parent=1 // pred_fallthru
      _
    // Predicated region
    $region34: #{tpu_custom_call.1} parent=1 // pred_check
      _
    $region35: #{tpu_custom_call.1} parent=1 // pred_check_branch
      %178 = sbr.rel (0) target = $region37
    $region36: #{tpu_custom_call.1} parent=1 // pred_region
      %179 = dma.done [#allocation5], 128
    $region37: #{tpu_custom_call.1} parent=1 // pred_fallthru
      _
    %180 = vsyncpa [#allocation4], 1
    %181 = vsyncpa [#allocation7], 1
    %182 = vsyncpa [#allocation5], 1

</llo_original>
